<compile_context>
chip_gen: v6e
topology: v6e:2x2x1
jax: 0.10.0
libtpu: 0.0.40
codegen_flags: <defaults>
</compile_context>

<pallas_src>
import functools

import jax
import jax.numpy as jnp
import numpy as np
from jax import lax
from jax.experimental import pallas as pl
from jax.experimental.pallas import tpu as pltpu

BN_EPS = 1e-5
_VMEM_LIMIT_BYTES = 32 * 1024 * 1024      # scoped VMEM limit: safe on v5e/v6e/v7x
_BLOCK_BUDGET_BYTES = 24 * 1024 * 1024    # budget for the double-buffered large blocks
_MAX_TILE_T = 4096                        # lane-tile cap (multiple of 128)
_MAX_TILE_N = 8                           # cap on the static unroll over batch rows
_FUSED_LIMIT_BYTES = 2 * 1024 * 1024      # whole-problem threshold for the fused path


def _round_up(a, b):
    return (a + b - 1) // b * b


def _choose_tiles(N, C_in, C_out, T, x_elem_bytes):
    """(tile_n, tile_t): tile_t multiple of 128 (or full T), tile_n a divisor of N."""
    col_bytes = C_in * x_elem_bytes + C_out * 4          # one time-column (x in + out), per batch row
    budget = max(_BLOCK_BUDGET_BYTES - 2 * C_out * C_in * 4, 2 * col_bytes * 128)
    if T <= 512:
        tile_t = T                                       # full dim -> always a legal block
    else:
        max_cols = (budget // (2 * col_bytes)) // 128 * 128
        tile_t = int(min(_MAX_TILE_T, _round_up(T, 128), max(128, max_cols)))
    tile_n = 1
    for d in range(1, min(N, _MAX_TILE_N) + 1):
        if N % d == 0 and 2 * d * tile_t * col_bytes <= budget:
            tile_n = d
            if d * tile_t * C_in * x_elem_bytes >= (1 << 20):   # >= ~1 MiB of x per step
                break
    return tile_n, tile_t


def _affine_relu(x_row, w, b):
    """relu(W @ x + b) for one (C_in, tile_t) slice -> (C_out, tile_t) f32 (MXU + VPU)."""
    y = jnp.dot(w, x_row, preferred_element_type=jnp.float32) + b
    return jnp.maximum(y, 0.0)


def _stats_kernel(x_ref, w_ref, b_ref, sum_ref, sq_ref, *, T, tile_t, mask_t):
    """Pass 1: per-N-block partial per-channel sum / sum-of-squares of relu(Wx+b)."""

    @pl.when(pl.program_id(1) == 0)           # new N block -> fresh resident accumulators
    def _():
        sum_ref[...] = jnp.zeros_like(sum_ref)
        sq_ref[...] = jnp.zeros_like(sq_ref)

    w = w_ref[...]
    b = b_ref[...]
    c_out = w.shape[0]
    s = jnp.zeros((c_out, 1), jnp.float32)
    q = jnp.zeros((c_out, 1), jnp.float32)
    for n in range(x_ref.shape[0]):           # static unroll over the small N tile
        y = _affine_relu(x_ref[n], w, b)      # (C_out, tile_t)
        if mask_t:
            # Ragged last T block: lanes >= T hold undefined data (no host-side pad),
            # so zero them unconditionally to keep the batch statistics clean.
            col = pl.program_id(1) * tile_t + lax.broadcasted_iota(jnp.int32, y.shape, 1)
            y = jnp.where(col < T, y, 0.0)
        s = s + jnp.sum(y, axis=-1, keepdims=True)
        q = q + jnp.sum(y * y, axis=-1, keepdims=True)
    sum_ref[0] += s
    sq_ref[0] += q


def _normalize_kernel(x_ref, w_ref, b_ref, scale_ref, shift_ref, o_ref):
    """Pass 2: recompute affine+ReLU per tile and apply the pre-folded BN scale/shift."""
    w = w_ref[...]
    b = b_ref[...]
    scale = scale_ref[...]
    shift = shift_ref[...]
    for n in range(x_ref.shape[0]):
        y = _affine_relu(x_ref[n], w, b)
        # Out-of-bounds columns of a ragged last T block are dropped by the masked writeback.
        o_ref[n] = (y * scale + shift).astype(o_ref.dtype)


def _fused_kernel(x_ref, w_ref, b_ref, g_ref, be_ref, o_ref, y_scr, *, count):
    """Single-launch path for tiny problems: y stays resident in VMEM scratch."""
    w = w_ref[...]
    b = b_ref[...]
    c_out = w.shape[0]
    s = jnp.zeros((c_out, 1), jnp.float32)
    q = jnp.zeros((c_out, 1), jnp.float32)
    for n in range(x_ref.shape[0]):
        y = _affine_relu(x_ref[n], w, b)
        y_scr[n] = y
        s = s + jnp.sum(y, axis=-1, keepdims=True)
        q = q + jnp.sum(y * y, axis=-1, keepdims=True)
    inv_n = 1.0 / count
    mean = s * inv_n
    var = jnp.maximum(q * inv_n - mean * mean, 0.0)      # clamp: no rsqrt of tiny negatives
    scale = lax.rsqrt(var + BN_EPS) * g_ref[...]
    shift = be_ref[...] - mean * scale
    for n in range(x_ref.shape[0]):
        o_ref[n] = (y_scr[n] * scale + shift).astype(o_ref.dtype)


def affine_relu_bn(x_nct, weight, bias, gamma, beta, *, use_bf16_matmul=False):
    """Conv1d(k=1) -> ReLU -> BatchNorm1d (training / batch statistics), NCT layout.

    x_nct:  (N, C_in, T);  weight: (C_out, C_in);  bias/gamma/beta: (C_out,)
    returns (N, C_out, T) float32
    """
    N, C_in, T = x_nct.shape
    C_out = weight.shape[0]

    op_dtype = jnp.bfloat16 if use_bf16_matmul else jnp.float32
    x_in = x_nct.astype(op_dtype)        # cast ONCE in the wrapper: HBM streams 2 B/elem when bf16
    w = weight.astype(op_dtype)
    x_bytes = 2 if use_bf16_matmul else 4

    b_col = bias.reshape(C_out, 1).astype(jnp.float32)
    g_col = gamma.reshape(C_out, 1).astype(jnp.float32)
    be_col = beta.reshape(C_out, 1).astype(jnp.float32)
    count = float(N * T)

    # ---- Fast path: whole problem (x + y scratch + out) comfortably fits VMEM. ----
    fused_bytes = N * C_in * T * x_bytes + 2 * N * C_out * T * 4 + C_out * C_in * x_bytes
    if N <= _MAX_TILE_N and fused_bytes <= _FUSED_LIMIT_BYTES:
        return pl.pallas_call(
            functools.partial(_fused_kernel, count=count),
            out_shape=jax.ShapeDtypeStruct((N, C_out, T), jnp.float32),
            grid=(1,),
            in_specs=[pl.BlockSpec((N, C_in, T), lambda i: (0, 0, 0)),
                      pl.BlockSpec((C_out, C_in), lambda i: (0, 0)),
                      pl.BlockSpec((C_out, 1), lambda i: (0, 0)),
                      pl.BlockSpec((C_out, 1), lambda i: (0, 0)),
                      pl.BlockSpec((C_out, 1), lambda i: (0, 0))],
            out_specs=pl.BlockSpec((N, C_out, T), lambda i: (0, 0, 0)),
            scratch_shapes=[pltpu.VMEM((N, C_out, T), jnp.float32)],
            compiler_params=pltpu.CompilerParams(vmem_limit_bytes=_VMEM_LIMIT_BYTES),
        )(x_in, w, b_col, g_col, be_col)

    # ---- Two-pass streaming path. ----
    tile_n, tile_t = _choose_tiles(N, C_in, C_out, T, x_bytes)
    n_blocks = N // tile_n
    n_t = pl.cdiv(T, tile_t)
    grid = (n_blocks, n_t)
    mask_t = (T % tile_t) != 0           # ragged last T block -> mask stats unconditionally

    x_spec = pl.BlockSpec((tile_n, C_in, tile_t), lambda n, t: (n, 0, t))
    w_spec = pl.BlockSpec((C_out, C_in), lambda n, t: (0, 0))
    vec_spec = pl.BlockSpec((C_out, 1), lambda n, t: (0, 0))
    stat_spec = pl.BlockSpec((1, C_out, 1), lambda n, t: (n, 0, 0))

    # Pass 1: per-N-block partial sums (N axis "parallel" -> megacore-friendly on v7x;
    # T axis "arbitrary" for the resident accumulation, and last in the grid).
    part_shape = jax.ShapeDtypeStruct((n_blocks, C_out, 1), jnp.float32)
    part_sum, part_sq = pl.pallas_call(
        functools.partial(_stats_kernel, T=T, tile_t=tile_t, mask_t=mask_t),
        out_shape=(part_shape, part_shape),
        grid=grid,
        in_specs=[x_spec, w_spec, vec_spec],
        out_specs=(stat_spec, stat_spec),
        compiler_params=pltpu.CompilerParams(
            dimension_semantics=("parallel", "arbitrary"),
            vmem_limit_bytes=_VMEM_LIMIT_BYTES),
    )(x_in, w, b_col)

    # Tiny JAX epilogue: fold partials and hoist the BN finalization out of pass 2.
    ch_sum = jnp.sum(part_sum, axis=0)                    # (C_out, 1)
    ch_sq = jnp.sum(part_sq, axis=0)
    mean = ch_sum / count
    var = jnp.maximum(ch_sq / count - mean * mean, 0.0)   # biased var (PyTorch training), clamped
    scale = lax.rsqrt(var + BN_EPS) * g_col
    shift = be_col - mean * scale

    # Pass 2: recompute affine+ReLU per tile and normalize (no y round-trip through HBM,
    # no host-side pad/slice; ragged output columns are masked on writeback).
    out = pl.pallas_call(
        _normalize_kernel,
        out_shape=jax.ShapeDtypeStruct((N, C_out, T), jnp.float32),
        grid=grid,
        in_specs=[x_spec, w_spec, vec_spec, vec_spec, vec_spec],
        out_specs=pl.BlockSpec((tile_n, C_out, tile_t), lambda n, t: (n, 0, t)),
        compiler_params=pltpu.CompilerParams(
            dimension_semantics=("parallel", "parallel"),
            vmem_limit_bytes=_VMEM_LIMIT_BYTES),
    )(x_in, w, b_col, scale, shift)
    return out


def _reference(x_nct, weight, bias, gamma, beta):
    """Pure-JAX reference of Conv1d(k=1) -> ReLU -> BatchNorm1d (training mode)."""
    y = jnp.einsum('nct,oc->not', x_nct.astype(jnp.float32), weight.astype(jnp.float32))
    y = y + bias[None, :, None]
    y = jnp.maximum(y, 0.0)
    mean = jnp.mean(y, axis=(0, 2), keepdims=True)
    var = jnp.mean((y - mean) ** 2, axis=(0, 2), keepdims=True)
    return (y - mean) / jnp.sqrt(var + BN_EPS) * gamma[None, :, None] + beta[None, :, None]


# TODO(synk): BatchNorm1d running_mean/running_var momentum updates are a training-time
# buffer side effect; they do not affect the forward output (which uses batch statistics).

if __name__ == "__main__":
    key = jax.random.PRNGKey(0)

    def make_case(k, N, C_in, T, C_out):
        k_x, k_w, k_b = jax.random.split(k, 3)
        x = jax.random.normal(k_x, (N, C_in, T), dtype=jnp.float32)
        bound = 1.0 / np.sqrt(C_in)
        weight = jax.random.uniform(k_w, (C_out, C_in), jnp.float32, -bound, bound)
        bias = jax.random.uniform(k_b, (C_out,), jnp.float32, -bound, bound)
        gamma = jnp.ones((C_out,), jnp.float32)    # BatchNorm1d default init
        beta = jnp.zeros((C_out,), jnp.float32)
        return x, weight, bias, gamma, beta

    def check(out, ref, tol):
        np.testing.assert_allclose(np.asarray(out), np.asarray(ref), rtol=tol, atol=tol)

    k1, k2, k3 = jax.random.split(key, 3)

    # Case 1: tiny shape typical of the module -> fused single-kernel path.
    args1 = make_case(k1, N=2, C_in=16, T=16, C_out=32)
    check(jax.block_until_ready(affine_relu_bn(*args1)), _reference(*args1), 1e-4)

    # Case 2: two-pass path, tile_n > 1, two N blocks, ragged (masked) last T block.
    args2 = make_case(k2, N=16, C_in=64, T=700, C_out=96)
    check(jax.block_until_ready(affine_relu_bn(*args2)), _reference(*args2), 1e-4)

    # Case 3: two-pass path with several T blocks (accumulation over the T grid axis).
    args3 = make_case(k3, N=2, C_in=16, T=9000, C_out=32)
    check(jax.block_until_ready(affine_relu_bn(*args3)), _reference(*args3), 1e-4)

    # bf16 streaming path: compare against the f32 reference applied to bf16-rounded
    # operands (the kernel accumulates in f32 on the MXU, so only summation order differs).
    def bf16_args(args):
        x, w, b, g, be = args
        return (x.astype(jnp.bfloat16).astype(jnp.float32),
                w.astype(jnp.bfloat16).astype(jnp.float32), b, g, be)

    check(jax.block_until_ready(affine_relu_bn(*args1, use_bf16_matmul=True)),
          _reference(*bf16_args(args1)), 2e-3)
    check(jax.block_until_ready(affine_relu_bn(*args2, use_bf16_matmul=True)),
          _reference(*bf16_args(args2)), 2e-3)

    print("KERNEL_OK")
</pallas_src>

<mosaic_0001>
module attributes {stable_mosaic.version = 11 : i64} {
  func.func @_fused_kernel(%arg0: i32, %arg1: memref<2x16x16xf32, #tpu.memory_space<vmem>>, %arg2: memref<32x16xf32, #tpu.memory_space<vmem>>, %arg3: memref<32x1xf32, #tpu.memory_space<vmem>>, %arg4: memref<32x1xf32, #tpu.memory_space<vmem>>, %arg5: memref<32x1xf32, #tpu.memory_space<vmem>>, %arg6: memref<2x32x16xf32, #tpu.memory_space<vmem>>, %arg7: memref<2x32x16xf32, #tpu.memory_space<vmem>>) attributes {dimension_semantics = [#tpu.dimension_semantics<arbitrary>], iteration_bounds = array<i64: 1>, scalar_prefetch = 0 : i64, scratch_operands = 1 : i64, tpu.core_type = #tpu.core_type<tc>, window_params = [{pipeline_mode = #tpu.pipeline_mode<synchronous>, transform_indices = @transform_0, window_bounds = array<i64: 2, 16, 16>}, {pipeline_mode = #tpu.pipeline_mode<synchronous>, transform_indices = @transform_1, window_bounds = array<i64: 32, 16>}, {pipeline_mode = #tpu.pipeline_mode<synchronous>, transform_indices = @transform_2, window_bounds = array<i64: 32, 1>}, {pipeline_mode = #tpu.pipeline_mode<synchronous>, transform_indices = @transform_3, window_bounds = array<i64: 32, 1>}, {pipeline_mode = #tpu.pipeline_mode<synchronous>, transform_indices = @transform_4, window_bounds = array<i64: 32, 1>}, {pipeline_mode = #tpu.pipeline_mode<synchronous>, transform_indices = @transform_5, window_bounds = array<i64: 2, 32, 16>}]} {
    %c0 = arith.constant 0 : index
    %c0_0 = arith.constant 0 : index
    %0 = vector.load %arg2[%c0, %c0_0] : memref<32x16xf32, #tpu.memory_space<vmem>>, vector<32x16xf32>
    %c0_1 = arith.constant 0 : index
    %c0_2 = arith.constant 0 : index
    %1 = vector.load %arg3[%c0_1, %c0_2] : memref<32x1xf32, #tpu.memory_space<vmem>>, vector<32x1xf32>
    %cst = arith.constant 0.000000e+00 : f32
    %2 = vector.broadcast %cst : f32 to vector<32x1xf32>
    %cst_3 = arith.constant 0.000000e+00 : f32
    %3 = vector.broadcast %cst_3 : f32 to vector<32x1xf32>
    %c0_4 = arith.constant 0 : index
    %c0_5 = arith.constant 0 : index
    %c0_6 = arith.constant 0 : index
    %4 = vector.load %arg1[%c0_4, %c0_5, %c0_6] : memref<2x16x16xf32, #tpu.memory_space<vmem>>, vector<1x16x16xf32>
    %5 = vector.shape_cast %4 : vector<1x16x16xf32> to vector<16x16xf32>
    %cst_7 = arith.constant dense<0.000000e+00> : vector<32x16xf32>
    %6 = tpu.matmul %0, %5, %cst_7 {dimension_numbers = #tpu.dot_dimension_numbers<[1], [0], [0], [1], [0, 0, 1, 1], [], []>} : vector<32x16xf32>, vector<16x16xf32>, vector<32x16xf32> -> vector<32x16xf32>
    %7 = vector.broadcast %1 : vector<32x1xf32> to vector<32x16xf32>
    %8 = arith.addf %6, %7 : vector<32x16xf32>
    %cst_8 = arith.constant 0.000000e+00 : f32
    %9 = vector.broadcast %cst_8 : f32 to vector<32x16xf32>
    %10 = arith.maximumf %8, %9 : vector<32x16xf32>
    %c0_9 = arith.constant 0 : index
    %c0_10 = arith.constant 0 : index
    %c0_11 = arith.constant 0 : index
    %11 = vector.load %arg7[%c0_9, %c0_10, %c0_11] : memref<2x32x16xf32, #tpu.memory_space<vmem>>, vector<1x32x16xf32>
    %12 = vector.shape_cast %11 : vector<1x32x16xf32> to vector<32x16xf32>
    %13 = vector.shape_cast %10 : vector<32x16xf32> to vector<1x32x16xf32>
    tpu.vector_store %arg7[%c0_9, %c0_10, %c0_11], %13 {strides = array<i32>} : memref<2x32x16xf32, #tpu.memory_space<vmem>>, vector<1x32x16xf32>,
    %cst_12 = arith.constant dense<0.000000e+00> : vector<32xf32>
    %14 = vector.multi_reduction <add>, %10, %cst_12 [1] : vector<32x16xf32> to vector<32xf32>
    %15 = vector.shape_cast %14 : vector<32xf32> to vector<32x1xf32>
    %16 = arith.addf %2, %15 : vector<32x1xf32>
    %17 = arith.mulf %10, %10 : vector<32x16xf32>
    %cst_13 = arith.constant dense<0.000000e+00> : vector<32xf32>
    %18 = vector.multi_reduction <add>, %17, %cst_13 [1] : vector<32x16xf32> to vector<32xf32>
    %19 = vector.shape_cast %18 : vector<32xf32> to vector<32x1xf32>
    %20 = arith.addf %3, %19 : vector<32x1xf32>
    %c1 = arith.constant 1 : index
    %c0_14 = arith.constant 0 : index
    %c0_15 = arith.constant 0 : index
    %21 = vector.load %arg1[%c1, %c0_14, %c0_15] : memref<2x16x16xf32, #tpu.memory_space<vmem>>, vector<1x16x16xf32>
    %22 = vector.shape_cast %21 : vector<1x16x16xf32> to vector<16x16xf32>
    %cst_16 = arith.constant dense<0.000000e+00> : vector<32x16xf32>
    %23 = tpu.matmul %0, %22, %cst_16 {dimension_numbers = #tpu.dot_dimension_numbers<[1], [0], [0], [1], [0, 0, 1, 1], [], []>} : vector<32x16xf32>, vector<16x16xf32>, vector<32x16xf32> -> vector<32x16xf32>
    %24 = vector.broadcast %1 : vector<32x1xf32> to vector<32x16xf32>
    %25 = arith.addf %23, %24 : vector<32x16xf32>
    %cst_17 = arith.constant 0.000000e+00 : f32
    %26 = vector.broadcast %cst_17 : f32 to vector<32x16xf32>
    %27 = arith.maximumf %25, %26 : vector<32x16xf32>
    %c1_18 = arith.constant 1 : index
    %c0_19 = arith.constant 0 : index
    %c0_20 = arith.constant 0 : index
    %28 = vector.load %arg7[%c1_18, %c0_19, %c0_20] : memref<2x32x16xf32, #tpu.memory_space<vmem>>, vector<1x32x16xf32>
    %29 = vector.shape_cast %28 : vector<1x32x16xf32> to vector<32x16xf32>
    %30 = vector.shape_cast %27 : vector<32x16xf32> to vector<1x32x16xf32>
    tpu.vector_store %arg7[%c1_18, %c0_19, %c0_20], %30 {strides = array<i32>} : memref<2x32x16xf32, #tpu.memory_space<vmem>>, vector<1x32x16xf32>,
    %cst_21 = arith.constant dense<0.000000e+00> : vector<32xf32>
    %31 = vector.multi_reduction <add>, %27, %cst_21 [1] : vector<32x16xf32> to vector<32xf32>
    %32 = vector.shape_cast %31 : vector<32xf32> to vector<32x1xf32>
    %33 = arith.addf %16, %32 : vector<32x1xf32>
    %34 = arith.mulf %27, %27 : vector<32x16xf32>
    %cst_22 = arith.constant dense<0.000000e+00> : vector<32xf32>
    %35 = vector.multi_reduction <add>, %34, %cst_22 [1] : vector<32x16xf32> to vector<32xf32>
    %36 = vector.shape_cast %35 : vector<32xf32> to vector<32x1xf32>
    %37 = arith.addf %20, %36 : vector<32x1xf32>
    %cst_23 = arith.constant 3.125000e-02 : f32
    %38 = vector.broadcast %cst_23 : f32 to vector<32x1xf32>
    %39 = arith.mulf %33, %38 : vector<32x1xf32>
    %cst_24 = arith.constant 3.125000e-02 : f32
    %40 = vector.broadcast %cst_24 : f32 to vector<32x1xf32>
    %41 = arith.mulf %37, %40 : vector<32x1xf32>
    %42 = arith.mulf %39, %39 : vector<32x1xf32>
    %43 = arith.subf %41, %42 : vector<32x1xf32>
    %cst_25 = arith.constant 0.000000e+00 : f32
    %44 = vector.broadcast %cst_25 : f32 to vector<32x1xf32>
    %45 = arith.maximumf %43, %44 : vector<32x1xf32>
    %cst_26 = arith.constant 9.99999974E-6 : f32
    %46 = vector.broadcast %cst_26 : f32 to vector<32x1xf32>
    %47 = arith.addf %45, %46 : vector<32x1xf32>
    %48 = math.rsqrt %47 : vector<32x1xf32>
    %c0_27 = arith.constant 0 : index
    %c0_28 = arith.constant 0 : index
    %49 = vector.load %arg4[%c0_27, %c0_28] : memref<32x1xf32, #tpu.memory_space<vmem>>, vector<32x1xf32>
    %50 = arith.mulf %48, %49 : vector<32x1xf32>
    %c0_29 = arith.constant 0 : index
    %c0_30 = arith.constant 0 : index
    %51 = vector.load %arg5[%c0_29, %c0_30] : memref<32x1xf32, #tpu.memory_space<vmem>>, vector<32x1xf32>
    %52 = arith.mulf %39, %50 : vector<32x1xf32>
    %53 = arith.subf %51, %52 : vector<32x1xf32>
    %c0_31 = arith.constant 0 : index
    %c0_32 = arith.constant 0 : index
    %c0_33 = arith.constant 0 : index
    %54 = vector.load %arg7[%c0_31, %c0_32, %c0_33] : memref<2x32x16xf32, #tpu.memory_space<vmem>>, vector<1x32x16xf32>
    %55 = vector.shape_cast %54 : vector<1x32x16xf32> to vector<32x16xf32>
    %56 = vector.broadcast %50 : vector<32x1xf32> to vector<32x16xf32>
    %57 = arith.mulf %55, %56 : vector<32x16xf32>
    %58 = vector.broadcast %53 : vector<32x1xf32> to vector<32x16xf32>
    %59 = arith.addf %57, %58 : vector<32x16xf32>
    %c0_34 = arith.constant 0 : index
    %c0_35 = arith.constant 0 : index
    %c0_36 = arith.constant 0 : index
    %60 = vector.load %arg6[%c0_34, %c0_35, %c0_36] : memref<2x32x16xf32, #tpu.memory_space<vmem>>, vector<1x32x16xf32>
    %61 = vector.shape_cast %60 : vector<1x32x16xf32> to vector<32x16xf32>
    %62 = vector.shape_cast %59 : vector<32x16xf32> to vector<1x32x16xf32>
    tpu.vector_store %arg6[%c0_34, %c0_35, %c0_36], %62 {strides = array<i32>} : memref<2x32x16xf32, #tpu.memory_space<vmem>>, vector<1x32x16xf32>,
    %c1_37 = arith.constant 1 : index
    %c0_38 = arith.constant 0 : index
    %c0_39 = arith.constant 0 : index
    %63 = vector.load %arg7[%c1_37, %c0_38, %c0_39] : memref<2x32x16xf32, #tpu.memory_space<vmem>>, vector<1x32x16xf32>
    %64 = vector.shape_cast %63 : vector<1x32x16xf32> to vector<32x16xf32>
    %65 = vector.broadcast %50 : vector<32x1xf32> to vector<32x16xf32>
    %66 = arith.mulf %64, %65 : vector<32x16xf32>
    %67 = vector.broadcast %53 : vector<32x1xf32> to vector<32x16xf32>
    %68 = arith.addf %66, %67 : vector<32x16xf32>
    %c1_40 = arith.constant 1 : index
    %c0_41 = arith.constant 0 : index
    %c0_42 = arith.constant 0 : index
    %69 = vector.load %arg6[%c1_40, %c0_41, %c0_42] : memref<2x32x16xf32, #tpu.memory_space<vmem>>, vector<1x32x16xf32>
    %70 = vector.shape_cast %69 : vector<1x32x16xf32> to vector<32x16xf32>
    %71 = vector.shape_cast %68 : vector<32x16xf32> to vector<1x32x16xf32>
    tpu.vector_store %arg6[%c1_40, %c0_41, %c0_42], %71 {strides = array<i32>} : memref<2x32x16xf32, #tpu.memory_space<vmem>>, vector<1x32x16xf32>,
    return
  }
  func.func @transform_0(%arg0: i32) -> (i32, i32, i32) {
    %c0_i32 = arith.constant 0 : i32
    %c0_i32_0 = arith.constant 0 : i32
    %c0_i32_1 = arith.constant 0 : i32
    %c0_i32_2 = arith.constant 0 : i32
    return %c0_i32, %c0_i32_0, %c0_i32_1 : i32, i32, i32
  }
  func.func @transform_1(%arg0: i32) -> (i32, i32) {
    %c0_i32 = arith.constant 0 : i32
    %c0_i32_0 = arith.constant 0 : i32
    %c0_i32_1 = arith.constant 0 : i32
    return %c0_i32, %c0_i32_0 : i32, i32
  }
  func.func @transform_2(%arg0: i32) -> (i32, i32) {
    %c0_i32 = arith.constant 0 : i32
    %c0_i32_0 = arith.constant 0 : i32
    %c0_i32_1 = arith.constant 0 : i32
    return %c0_i32, %c0_i32_0 : i32, i32
  }
  func.func @transform_3(%arg0: i32) -> (i32, i32) {
    %c0_i32 = arith.constant 0 : i32
    %c0_i32_0 = arith.constant 0 : i32
    %c0_i32_1 = arith.constant 0 : i32
    return %c0_i32, %c0_i32_0 : i32, i32
  }
  func.func @transform_4(%arg0: i32) -> (i32, i32) {
    %c0_i32 = arith.constant 0 : i32
    %c0_i32_0 = arith.constant 0 : i32
    %c0_i32_1 = arith.constant 0 : i32
    return %c0_i32, %c0_i32_0 : i32, i32
  }
  func.func @transform_5(%arg0: i32) -> (i32, i32, i32) {
    %c0_i32 = arith.constant 0 : i32
    %c0_i32_0 = arith.constant 0 : i32
    %c0_i32_1 = arith.constant 0 : i32
    %c0_i32_2 = arith.constant 0 : i32
    return %c0_i32, %c0_i32_0, %c0_i32_1 : i32, i32, i32
  }
}

</mosaic_0001>

<llo_original>
// kernel: tpu_custom_call.1
$region0: #{tpu_custom_call.1}
  #allocation0 [shape = 'u32[]', space=smem, size = 0x4, offset = 0x4, fixed_abs, tag = 'smem constant byte address 0x4 - core index']
  #allocation1 [shape = 'u32[144,128]{1,0:T(1,128)}', space=vmem, size = 0x12000, scoped, tag = 'internal scratch']
  #allocation2 [shape = 'f32[2,32,16]{2,1,0:T(8,128)}', space=vmem, size = 0x8000, scoped, tag = 'scratch operand']
  %s0 = inlined_call_operand.vmem [shape: f32[2,16,16], index: 0, kind: input, shape index: {}]
  %s1 = inlined_call_operand.vmem [shape: f32[32,16], index: 1, kind: input, shape index: {}]
  %s2 = inlined_call_operand.vmem [shape: f32[32,1], index: 2, kind: input, shape index: {}]
  %s3 = inlined_call_operand.vmem [shape: f32[32,1], index: 3, kind: input, shape index: {}]
  %s4 = inlined_call_operand.vmem [shape: f32[32,1], index: 4, kind: input, shape index: {}]
  %s5 = inlined_call_operand.vmem [shape: f32[2,32,16], index: 5, kind: output, shape index: {}]
  %s6 = sld [smem:[#allocation0]]
  $region30: #{tpu_custom_call.1} parent=0
    _
  %s8 = ssub.s32 1, %s6
  %s9 = scalar_select 0, %s8, %s6
  // Predicated region
  $region2: #{tpu_custom_call.1} parent=0 // pred_check
    _
  $region3: #{tpu_custom_call.1} parent=0 // pred_check_branch
    %11 = sbr.rel (0) target = $region5
  $region4: #{tpu_custom_call.1} parent=0 // pred_region
    _
  $region5: #{tpu_custom_call.1} parent=0 // pred_fallthru
    _
  // Predicated region
  $region6: #{tpu_custom_call.1} parent=0 // pred_check
    _
  $region7: #{tpu_custom_call.1} parent=0 // pred_check_branch
    %13 = sbr.rel (0) target = $region9
  $region8: #{tpu_custom_call.1} parent=0 // pred_region
    _
  $region9: #{tpu_custom_call.1} parent=0 // pred_fallthru
    _
  // Predicated region
  $region10: #{tpu_custom_call.1} parent=0 // pred_check
    _
  $region11: #{tpu_custom_call.1} parent=0 // pred_check_branch
    %15 = sbr.rel (0) target = $region13
  $region12: #{tpu_custom_call.1} parent=0 // pred_region
    _
  $region13: #{tpu_custom_call.1} parent=0 // pred_fallthru
    _
  // Predicated region
  $region14: #{tpu_custom_call.1} parent=0 // pred_check
    _
  $region15: #{tpu_custom_call.1} parent=0 // pred_check_branch
    %17 = sbr.rel (0) target = $region17
  $region16: #{tpu_custom_call.1} parent=0 // pred_region
    _
  $region17: #{tpu_custom_call.1} parent=0 // pred_fallthru
    _
  // Predicated region
  $region18: #{tpu_custom_call.1} parent=0 // pred_check
    _
  $region19: #{tpu_custom_call.1} parent=0 // pred_check_branch
    %19 = sbr.rel (0) target = $region21
  $region20: #{tpu_custom_call.1} parent=0 // pred_region
    _
  $region21: #{tpu_custom_call.1} parent=0 // pred_fallthru
    _
  %v20 = vld [vmem:[%s1] sm:$0xff]
  %v21 = vld [vmem:[%s1 + $0x8] sm:$0xff]
  %v22 = vld [vmem:[%s1 + $0x10] sm:$0xff]
  %v23 = vld [vmem:[%s1 + $0x18] sm:$0xff]
  %v24 = vld [vmem:[%s2] sm:$0xff]
  %v25 = vld [vmem:[%s2 + $0x8] sm:$0xff]
  %v26 = vld [vmem:[%s2 + $0x10] sm:$0xff]
  %v27 = vld [vmem:[%s2 + $0x18] sm:$0xff]
  %v28 = vld [vmem:[%s0] sm:$0xff]
  %v29 = vld [vmem:[%s0 + $0x8] sm:$0xff]
  %31 = vset.pattern.permute.xlu0 0
  %32 = vperm.xlu0 %31, %v24
  %v33 = vpop.permute.xlu0 %32
  %36 = vset.pattern.permute.xlu0 0
  %37 = vperm.xlu0 %36, %v25
  %v38 = vpop.permute.xlu0 %37
  %41 = vset.pattern.permute.xlu0 0
  %42 = vperm.xlu0 %41, %v26
  %v43 = vpop.permute.xlu0 %42
  %46 = vset.pattern.permute.xlu0 0
  %47 = vperm.xlu0 %46, %v27
  %v48 = vpop.permute.xlu0 %47
  %vm50 = vcmask 130048
  %v52 = vsel %vm50, %v20, 0
  %v55 = vsel %vm50, %v21, 0
  %v58 = vsel %vm50, %v22, 0
  %v61 = vsel %vm50, %v23, 0
  %63 = vmatprep.subr.mxu0 0.0
  %64 = vmatpush1.msra.mxu0 0.0
  %65 = vmatprep.subr.mxu0 0.0
  %66 = vmatpush1.msra.mxu0 0.0
  %67 = vmatprep.subr.mxu0 0.0
  %68 = vmatpush1.msra.mxu0 0.0
  %69 = vmatprep.subr.mxu0 0.0
  %70 = vmatpush1.msra.mxu0 0.0
  %71 = vmatprep.subr.mxu0 0.0
  %72 = vmatpush1.msra.mxu0 0.0
  %73 = vmatprep.subr.mxu0 0.0
  %74 = vmatpush1.msra.mxu0 0.0
  %75 = vmatprep.subr.mxu0 0.0
  %76 = vmatpush1.msra.mxu0 0.0
  %77 = vmatprep.subr.mxu0 0.0
  %78 = vmatpush1.msra.mxu0 0.0
  %79 = vmatprep.subr.mxu0 0.0
  %80 = vmatpush1.msra.mxu0 0.0
  %81 = vmatprep.subr.mxu0 0.0
  %82 = vmatpush1.msra.mxu0 0.0
  %83 = vmatprep.subr.mxu0 0.0
  %84 = vmatpush1.msra.mxu0 0.0
  %85 = vmatprep.subr.mxu0 0.0
  %86 = vmatpush1.msra.mxu0 0.0
  %87 = vmatprep.subr.mxu0 0.0
  %88 = vmatpush1.msra.mxu0 0.0
  %89 = vmatprep.subr.mxu0 0.0
  %90 = vmatpush1.msra.mxu0 0.0
  %91 = vmatprep.subr.mxu0 0.0
  %92 = vmatpush1.msra.mxu0 %v29
  %93 = vmatprep.subr.mxu0 0.0
  %94 = vmatpush1.msra.mxu0 %v28
  %95 = vmatprep.subr.mxu0 0.0
  %96 = vmatpush2.msra.mxu0 0.0
  %97 = vmatprep.subr.mxu0 0.0
  %98 = vmatpush2.msra.mxu0 0.0
  %99 = vmatprep.subr.mxu0 0.0
  %100 = vmatpush2.msra.mxu0 0.0
  %101 = vmatprep.subr.mxu0 0.0
  %102 = vmatpush2.msra.mxu0 0.0
  %103 = vmatprep.subr.mxu0 0.0
  %104 = vmatpush2.msra.mxu0 0.0
  %105 = vmatprep.subr.mxu0 0.0
  %106 = vmatpush2.msra.mxu0 0.0
  %107 = vmatprep.subr.mxu0 0.0
  %108 = vmatpush2.msra.mxu0 0.0
  %109 = vmatprep.subr.mxu0 0.0
  %110 = vmatpush2.msra.mxu0 0.0
  %111 = vmatprep.subr.mxu0 0.0
  %112 = vmatpush2.msra.mxu0 0.0
  %113 = vmatprep.subr.mxu0 0.0
  %114 = vmatpush2.msra.mxu0 0.0
  %115 = vmatprep.subr.mxu0 0.0
  %116 = vmatpush2.msra.mxu0 0.0
  %117 = vmatprep.subr.mxu0 0.0
  %118 = vmatpush2.msra.mxu0 0.0
  %119 = vmatprep.subr.mxu0 0.0
  %120 = vmatpush2.msra.mxu0 0.0
  %121 = vmatprep.subr.mxu0 0.0
  %122 = vmatpush2.msra.mxu0 0.0
  %123 = vmatprep.subr.mxu0 0.0
  %124 = vmatpush2.msra.mxu0 0.0
  %125 = vmatprep.subr.mxu0 0.0
  %126 = vmatpush2.msra.mxu0 0.0
  %127 = vmatprep.mubr.f32.mxu0 0.0
  %128 = vmatmul.mubr.f32.gmra.mxu0 %v52
  %v129 = vpop.f32.mrf.mxu0
  %v130 = vadd.f32 %v33, %v129
  %v131 = vpop.f32.mrf.mxu0
  %132 = vmatprep.mubr.f32.mxu0 0.0
  %133 = vmatmul.mubr.f32.gmra.mxu0 %v55
  %v134 = vpop.f32.mrf.mxu0
  %v135 = vadd.f32 %v38, %v134
  %v136 = vpop.f32.mrf.mxu0
  %137 = vmatprep.mubr.f32.mxu0 0.0
  %138 = vmatmul.mubr.f32.gmra.mxu0 %v58
  %v139 = vpop.f32.mrf.mxu0
  %v140 = vadd.f32 %v43, %v139
  %v141 = vpop.f32.mrf.mxu0
  %142 = vmatprep.mubr.f32.mxu0 0.0
  %143 = vmatmul.mubr.f32.gmra.mxu0 %v61
  %v144 = vpop.f32.mrf.mxu0
  %v145 = vadd.f32 %v48, %v144
  %v146 = vpop.f32.mrf.mxu0
  %147 = vdwg.mxu0
  %v148 = vmax.f32 %v130, 0.0
  %v149 = vmax.f32 %v135, 0.0
  %v150 = vmax.f32 %v140, 0.0
  %v151 = vmax.f32 %v145, 0.0
  %152 = vst.msk [vmem:[#allocation2] sm:$0xff] %vm50, %v148
  %153 = vst.msk [vmem:[#allocation2 + $0x8] sm:$0xff] %vm50, %v149
  %154 = vst.msk [vmem:[#allocation2 + $0x10] sm:$0xff] %vm50, %v150
  %155 = vst.msk [vmem:[#allocation2 + $0x18] sm:$0xff] %vm50, %v151
  %v156 = vsel %vm50, %v148, 0.0
  %157 = vadd.xlane.f32.xlu0 %v156
  %v158 = vpop.xlane.xlu0 %157
  %v159 = vsel %vm50, %v149, 0.0
  %160 = vadd.xlane.f32.xlu0 %v159
  %v161 = vpop.xlane.xlu0 %160
  %v162 = vsel %vm50, %v150, 0.0
  %163 = vadd.xlane.f32.xlu0 %v162
  %v164 = vpop.xlane.xlu0 %163
  %v165 = vsel %vm50, %v151, 0.0
  %166 = vadd.xlane.f32.xlu0 %v165
  %v167 = vpop.xlane.xlu0 %166
  %v168 = vadd.f32 %v158, 0.0
  %v169 = vadd.f32 %v161, 0.0
  %v170 = vadd.f32 %v164, 0.0
  %v171 = vadd.f32 %v167, 0.0
  %v172 = vmul.f32 %v148, %v148
  %v173 = vmul.f32 %v149, %v149
  %v174 = vmul.f32 %v150, %v150
  %v175 = vmul.f32 %v151, %v151
  %v176 = vsel %vm50, %v172, 0.0
  %177 = vadd.xlane.f32.xlu0 %v176
  %v178 = vpop.xlane.xlu0 %177
  %v179 = vsel %vm50, %v173, 0.0
  %180 = vadd.xlane.f32.xlu0 %v179
  %v181 = vpop.xlane.xlu0 %180
  %v182 = vsel %vm50, %v174, 0.0
  %183 = vadd.xlane.f32.xlu0 %v182
  %v184 = vpop.xlane.xlu0 %183
  %v185 = vsel %vm50, %v175, 0.0
  %186 = vadd.xlane.f32.xlu0 %v185
  %v187 = vpop.xlane.xlu0 %186
  %v188 = vadd.f32 %v178, 0.0
  %v189 = vadd.f32 %v181, 0.0
  %v190 = vadd.f32 %v184, 0.0
  %v191 = vadd.f32 %v187, 0.0
  %s192 = scalar_lea.vmem %s0, 16
  %v193 = vld [vmem:[%s192] sm:$0xff]
  %v194 = vld [vmem:[%s192 + $0x8] sm:$0xff]
  %195 = vmatprep.subr.mxu0 0.0
  %196 = vmatpush1.msra.mxu0 0.0
  %197 = vmatprep.subr.mxu0 0.0
  %198 = vmatpush1.msra.mxu0 0.0
  %199 = vmatprep.subr.mxu0 0.0
  %200 = vmatpush1.msra.mxu0 0.0
  %201 = vmatprep.subr.mxu0 0.0
  %202 = vmatpush1.msra.mxu0 0.0
  %203 = vmatprep.subr.mxu0 0.0
  %204 = vmatpush1.msra.mxu0 0.0
  %205 = vmatprep.subr.mxu0 0.0
  %206 = vmatpush1.msra.mxu0 0.0
  %207 = vmatprep.subr.mxu0 0.0
  %208 = vmatpush1.msra.mxu0 0.0
  %209 = vmatprep.subr.mxu0 0.0
  %210 = vmatpush1.msra.mxu0 0.0
  %211 = vmatprep.subr.mxu0 0.0
  %212 = vmatpush1.msra.mxu0 0.0
  %213 = vmatprep.subr.mxu0 0.0
  %214 = vmatpush1.msra.mxu0 0.0
  %215 = vmatprep.subr.mxu0 0.0
  %216 = vmatpush1.msra.mxu0 0.0
  %217 = vmatprep.subr.mxu0 0.0
  %218 = vmatpush1.msra.mxu0 0.0
  %219 = vmatprep.subr.mxu0 0.0
  %220 = vmatpush1.msra.mxu0 0.0
  %221 = vmatprep.subr.mxu0 0.0
  %222 = vmatpush1.msra.mxu0 0.0
  %223 = vmatprep.subr.mxu0 0.0
  %224 = vmatpush1.msra.mxu0 %v194
  %225 = vmatprep.subr.mxu0 0.0
  %226 = vmatpush1.msra.mxu0 %v193
  %227 = vmatprep.subr.mxu0 0.0
  %228 = vmatpush2.msra.mxu0 0.0
  %229 = vmatprep.subr.mxu0 0.0
  %230 = vmatpush2.msra.mxu0 0.0
  %231 = vmatprep.subr.mxu0 0.0
  %232 = vmatpush2.msra.mxu0 0.0
  %233 = vmatprep.subr.mxu0 0.0
  %234 = vmatpush2.msra.mxu0 0.0
  %235 = vmatprep.subr.mxu0 0.0
  %236 = vmatpush2.msra.mxu0 0.0
  %237 = vmatprep.subr.mxu0 0.0
  %238 = vmatpush2.msra.mxu0 0.0
  %239 = vmatprep.subr.mxu0 0.0
  %240 = vmatpush2.msra.mxu0 0.0
  %241 = vmatprep.subr.mxu0 0.0
  %242 = vmatpush2.msra.mxu0 0.0
  %243 = vmatprep.subr.mxu0 0.0
  %244 = vmatpush2.msra.mxu0 0.0
  %245 = vmatprep.subr.mxu0 0.0
  %246 = vmatpush2.msra.mxu0 0.0
  %247 = vmatprep.subr.mxu0 0.0
  %248 = vmatpush2.msra.mxu0 0.0
  %249 = vmatprep.subr.mxu0 0.0
  %250 = vmatpush2.msra.mxu0 0.0
  %251 = vmatprep.subr.mxu0 0.0
  %252 = vmatpush2.msra.mxu0 0.0
  %253 = vmatprep.subr.mxu0 0.0
  %254 = vmatpush2.msra.mxu0 0.0
  %255 = vmatprep.subr.mxu0 0.0
  %256 = vmatpush2.msra.mxu0 0.0
  %257 = vmatprep.subr.mxu0 0.0
  %258 = vmatpush2.msra.mxu0 0.0
  %259 = vmatprep.mubr.f32.mxu0 0.0
  %260 = vmatmul.mubr.f32.gmra.mxu0 %v52
  %v261 = vpop.f32.mrf.mxu0
  %v262 = vadd.f32 %v33, %v261
  %v263 = vpop.f32.mrf.mxu0
  %264 = vmatprep.mubr.f32.mxu0 0.0
  %265 = vmatmul.mubr.f32.gmra.mxu0 %v55
  %v266 = vpop.f32.mrf.mxu0
  %v267 = vadd.f32 %v38, %v266
  %v268 = vpop.f32.mrf.mxu0
  %269 = vmatprep.mubr.f32.mxu0 0.0
  %270 = vmatmul.mubr.f32.gmra.mxu0 %v58
  %v271 = vpop.f32.mrf.mxu0
  %v272 = vadd.f32 %v43, %v271
  %v273 = vpop.f32.mrf.mxu0
  %274 = vmatprep.mubr.f32.mxu0 0.0
  %275 = vmatmul.mubr.f32.gmra.mxu0 %v61
  %v276 = vpop.f32.mrf.mxu0
  %v277 = vadd.f32 %v48, %v276
  %v278 = vpop.f32.mrf.mxu0
  %279 = vdwg.mxu0
  %v280 = vmax.f32 %v262, 0.0
  %v281 = vmax.f32 %v267, 0.0
  %v282 = vmax.f32 %v272, 0.0
  %v283 = vmax.f32 %v277, 0.0
  %s284 = scalar_lea.vmem [#allocation2], 32
  %285 = vst.msk [vmem:[%s284] sm:$0xff] %vm50, %v280
  %286 = vst.msk [vmem:[%s284 + $0x8] sm:$0xff] %vm50, %v281
  %287 = vst.msk [vmem:[%s284 + $0x10] sm:$0xff] %vm50, %v282
  %288 = vst.msk [vmem:[%s284 + $0x18] sm:$0xff] %vm50, %v283
  %v289 = vsel %vm50, %v280, 0.0
  %290 = vadd.xlane.f32.xlu0 %v289
  %v291 = vpop.xlane.xlu0 %290
  %v292 = vsel %vm50, %v281, 0.0
  %293 = vadd.xlane.f32.xlu0 %v292
  %v294 = vpop.xlane.xlu0 %293
  %v295 = vsel %vm50, %v282, 0.0
  %296 = vadd.xlane.f32.xlu0 %v295
  %v297 = vpop.xlane.xlu0 %296
  %v298 = vsel %vm50, %v283, 0.0
  %299 = vadd.xlane.f32.xlu0 %v298
  %v300 = vpop.xlane.xlu0 %299
  %v301 = vadd.f32 %v168, %v291
  %v302 = vadd.f32 %v169, %v294
  %v303 = vadd.f32 %v170, %v297
  %v304 = vadd.f32 %v171, %v300
  %v305 = vmul.f32 %v280, %v280
  %v306 = vmul.f32 %v281, %v281
  %v307 = vmul.f32 %v282, %v282
  %v308 = vmul.f32 %v283, %v283
  %v309 = vsel %vm50, %v305, 0.0
  %310 = vadd.xlane.f32.xlu0 %v309
  %v311 = vpop.xlane.xlu0 %310
  %v312 = vsel %vm50, %v306, 0.0
  %313 = vadd.xlane.f32.xlu0 %v312
  %v314 = vpop.xlane.xlu0 %313
  %v315 = vsel %vm50, %v307, 0.0
  %316 = vadd.xlane.f32.xlu0 %v315
  %v317 = vpop.xlane.xlu0 %316
  %v318 = vsel %vm50, %v308, 0.0
  %319 = vadd.xlane.f32.xlu0 %v318
  %v320 = vpop.xlane.xlu0 %319
  %v321 = vadd.f32 %v188, %v311
  %v322 = vadd.f32 %v189, %v314
  %v323 = vadd.f32 %v190, %v317
  %v324 = vadd.f32 %v191, %v320
  %v325 = vmul.f32 %v301, 0.03125
  %v326 = vmul.f32 %v302, 0.03125
  %v327 = vmul.f32 %v303, 0.03125
  %v328 = vmul.f32 %v304, 0.03125
  %v329 = vmul.f32 %v321, 0.03125
  %v330 = vmul.f32 %v322, 0.03125
  %v331 = vmul.f32 %v323, 0.03125
  %v332 = vmul.f32 %v324, 0.03125
  %v333 = vmul.f32 %v325, %v325
  %v334 = vmul.f32 %v326, %v326
  %v335 = vmul.f32 %v327, %v327
  %v336 = vmul.f32 %v328, %v328
  %v337 = vsub.f32 %v329, %v333
  %v338 = vsub.f32 %v330, %v334
  %v339 = vsub.f32 %v331, %v335
  %v340 = vsub.f32 %v332, %v336
  %v341 = vmax.f32 %v337, 0.0
  %v342 = vmax.f32 %v338, 0.0
  %v343 = vmax.f32 %v339, 0.0
  %v344 = vmax.f32 %v340, 0.0
  %v345 = vadd.f32 %v341, 1e-05
  %v346 = vadd.f32 %v342, 1e-05
  %v347 = vadd.f32 %v343, 1e-05
  %v348 = vadd.f32 %v344, 1e-05
  %v349 = vrsqrt.pop %v345
  %v350 = vrsqrt.pop %v346
  %v351 = vrsqrt.pop %v347
  %v352 = vrsqrt.pop %v348
  %v353 = vld [vmem:[%s3] sm:$0xff]
  %v354 = vld [vmem:[%s3 + $0x8] sm:$0xff]
  %v355 = vld [vmem:[%s3 + $0x10] sm:$0xff]
  %v356 = vld [vmem:[%s3 + $0x18] sm:$0xff]
  %v357 = vmul.f32 %v349, %v353
  %v358 = vmul.f32 %v350, %v354
  %v359 = vmul.f32 %v351, %v355
  %v360 = vmul.f32 %v352, %v356
  %v361 = vld [vmem:[%s4] sm:$0xff]
  %v362 = vld [vmem:[%s4 + $0x8] sm:$0xff]
  %v363 = vld [vmem:[%s4 + $0x10] sm:$0xff]
  %v364 = vld [vmem:[%s4 + $0x18] sm:$0xff]
  %v365 = vmul.f32 %v325, %v357
  %v366 = vmul.f32 %v326, %v358
  %v367 = vmul.f32 %v327, %v359
  %v368 = vmul.f32 %v328, %v360
  %v369 = vsub.f32 %v361, %v365
  %v370 = vsub.f32 %v362, %v366
  %v371 = vsub.f32 %v363, %v367
  %v372 = vsub.f32 %v364, %v368
  %v373 = vld [vmem:[#allocation2] sm:$0xff]
  %v374 = vld [vmem:[#allocation2 + $0x8] sm:$0xff]
  %v375 = vld [vmem:[#allocation2 + $0x10] sm:$0xff]
  %v376 = vld [vmem:[#allocation2 + $0x18] sm:$0xff]
  %378 = vset.pattern.permute.xlu0 0
  %379 = vperm.xlu0 %378, %v357
  %v380 = vpop.permute.xlu0 %379
  %383 = vset.pattern.permute.xlu0 0
  %384 = vperm.xlu0 %383, %v358
  %v385 = vpop.permute.xlu0 %384
  %388 = vset.pattern.permute.xlu0 0
  %389 = vperm.xlu0 %388, %v359
  %v390 = vpop.permute.xlu0 %389
  %393 = vset.pattern.permute.xlu0 0
  %394 = vperm.xlu0 %393, %v360
  %v395 = vpop.permute.xlu0 %394
  %v397 = vmul.f32 %v373, %v380
  %v398 = vmul.f32 %v374, %v385
  %v399 = vmul.f32 %v375, %v390
  %v400 = vmul.f32 %v376, %v395
  %402 = vset.pattern.permute.xlu0 0
  %403 = vperm.xlu0 %402, %v369
  %v404 = vpop.permute.xlu0 %403
  %407 = vset.pattern.permute.xlu0 0
  %408 = vperm.xlu0 %407, %v370
  %v409 = vpop.permute.xlu0 %408
  %412 = vset.pattern.permute.xlu0 0
  %413 = vperm.xlu0 %412, %v371
  %v414 = vpop.permute.xlu0 %413
  %417 = vset.pattern.permute.xlu0 0
  %418 = vperm.xlu0 %417, %v372
  %v419 = vpop.permute.xlu0 %418
  %v421 = vadd.f32 %v397, %v404
  %v422 = vadd.f32 %v398, %v409
  %v423 = vadd.f32 %v399, %v414
  %v424 = vadd.f32 %v400, %v419
  %425 = vst.msk [vmem:[%s5] sm:$0xff] %vm50, %v421
  %426 = vst.msk [vmem:[%s5 + $0x8] sm:$0xff] %vm50, %v422
  %427 = vst.msk [vmem:[%s5 + $0x10] sm:$0xff] %vm50, %v423
  %428 = vst.msk [vmem:[%s5 + $0x18] sm:$0xff] %vm50, %v424
  %v429 = vld [vmem:[%s284] sm:$0xff]
  %v430 = vld [vmem:[%s284 + $0x8] sm:$0xff]
  %v431 = vld [vmem:[%s284 + $0x10] sm:$0xff]
  %v432 = vld [vmem:[%s284 + $0x18] sm:$0xff]
  %v433 = vmul.f32 %v429, %v380
  %v434 = vmul.f32 %v430, %v385
  %v435 = vmul.f32 %v431, %v390
  %v436 = vmul.f32 %v432, %v395
  %v437 = vadd.f32 %v433, %v404
  %v438 = vadd.f32 %v434, %v409
  %v439 = vadd.f32 %v435, %v414
  %v440 = vadd.f32 %v436, %v419
  %s441 = scalar_lea.vmem %s5, 32
  %442 = vst.msk [vmem:[%s441] sm:$0xff] %vm50, %v437
  %443 = vst.msk [vmem:[%s441 + $0x8] sm:$0xff] %vm50, %v438
  %444 = vst.msk [vmem:[%s441 + $0x10] sm:$0xff] %vm50, %v439
  %445 = vst.msk [vmem:[%s441 + $0x18] sm:$0xff] %vm50, %v440
  // Predicated region
  $region22: #{tpu_custom_call.1} parent=0 // pred_check
    _
  $region23: #{tpu_custom_call.1} parent=0 // pred_check_branch
    %447 = sbr.rel (0) target = $region25
  $region24: #{tpu_custom_call.1} parent=0 // pred_region
    _
  $region25: #{tpu_custom_call.1} parent=0 // pred_fallthru
    _
  // Predicated region
  $region26: #{tpu_custom_call.1} parent=0 // pred_check
    _
  $region27: #{tpu_custom_call.1} parent=0 // pred_check_branch
    %449 = sbr.rel (0) target = $region29
  $region28: #{tpu_custom_call.1} parent=0 // pred_region
    _
  $region29: #{tpu_custom_call.1} parent=0 // pred_fallthru
    _

</llo_original>
